<compile_context>
chip_gen: v7x
topology: tpu7x:2x2x1
jax: 0.10.0
libtpu: 0.0.40
codegen_flags: <defaults>
</compile_context>

<pallas_src>
import numpy as np
import jax
import jax.numpy as jnp
from jax.experimental import pallas as pl
from jax.experimental.pallas import tpu as pltpu

_TARGET_TILE_BYTES = 4 * 1024 * 1024   # per-operand tile target; in+out double-buffered ~16 MiB VMEM
_MAX_LANE_TILE = 2048                  # lane-axis tile cap (multiple of 128)


def _quad_mul_kernel(x_ref, wa_ref, wb_ref, wc_ref, o_ref):
    # Separable quadrature weights: out = x * w_lead * w_sub * w_lane.
    # wa: (a,1,1), wb: (1,b,1), wc: (1,1,c) -- combined once, then one
    # full-tile multiply against x (f32 math, cast only on store).
    w = wa_ref[...] * wb_ref[...] * wc_ref[...]
    o_ref[...] = (x_ref[...].astype(jnp.float32) * w).astype(o_ref.dtype)


def _choose_blocks(A, B, C, in_itemsize, out_itemsize):
    """Pick (a_blk, b_blk, c_blk) respecting the (8,128) rule and a VMEM budget."""
    itemsize = max(int(in_itemsize), int(out_itemsize))
    target_elems = max(1024, _TARGET_TILE_BYTES // itemsize)
    # lane axis: full extent (always legal) or a large multiple of 128
    c_blk = C if C <= _MAX_LANE_TILE else _MAX_LANE_TILE
    # sublane axis: full extent or a multiple of 8, bounded by the budget
    rem = max(1, target_elems // c_blk)
    b_blk = B if B <= max(8, rem) else max(8, (rem // 8) * 8)
    # leading axis: fill the remaining budget
    rem2 = max(1, target_elems // (c_blk * b_blk))
    a_blk = min(A, rem2)
    return a_blk, b_blk, c_blk


def _weight_spec(w, axis, blk):
    """BlockSpec for a weight factor living on one axis of the 3-D view."""
    if w.shape[axis] > 1:
        bs = [1, 1, 1]
        bs[axis] = blk
        if axis == 0:
            im = lambda a, b, c: (a, 0, 0)
        elif axis == 1:
            im = lambda a, b, c: (0, b, 0)
        else:
            im = lambda a, b, c: (0, 0, c)
        return pl.BlockSpec(tuple(bs), im)
    # trivial (1,1,1) ones factor — single resident block
    return pl.BlockSpec((1, 1, 1), lambda a, b, c: (0, 0, 0))


def _quad_multiply(x3, w_lead, w_sub, w_lane, out_dtype):
    """x3: (A, B, C) contiguous view; weights: (A,1,1)/(1,B,1)/(1,1,C) or (1,1,1)."""
    A, B, C = x3.shape
    a_blk, b_blk, c_blk = _choose_blocks(
        A, B, C, x3.dtype.itemsize, np.dtype(out_dtype).itemsize)
    grid = (pl.cdiv(A, a_blk), pl.cdiv(B, b_blk), pl.cdiv(C, c_blk))
    x_spec = pl.BlockSpec((a_blk, b_blk, c_blk), lambda a, b, c: (a, b, c))
    return pl.pallas_call(
        _quad_mul_kernel,
        out_shape=jax.ShapeDtypeStruct((A, B, C), out_dtype),
        grid=grid,
        in_specs=[
            x_spec,
            _weight_spec(w_lead, 0, a_blk),
            _weight_spec(w_sub, 1, b_blk),
            _weight_spec(w_lane, 2, c_blk),
        ],
        out_specs=x_spec,
        compiler_params=pltpu.CompilerParams(
            dimension_semantics=("parallel", "parallel", "parallel")),
    )(x3, w_lead, w_sub, w_lane)


def trapezoidal_weights(g):
    """Trapezoidal-rule quadrature weights for 1-D sampling points g (float32)."""
    g = jnp.asarray(g, dtype=jnp.float32)
    n = int(g.shape[0])
    if n < 2:
        # degenerate single-sample grid: unit weight (avoids OOB indexing)
        return jnp.ones((n,), jnp.float32)
    h = jnp.zeros_like(g)
    h = h.at[1:-1].set(g[2:] - g[:-2])
    h = h.at[0].set(g[1] - g[0])
    h = h.at[-1].set(g[-1] - g[-2])
    return 0.5 * h


class BaseIntegrationQuadrature:
    """Mirrors the PyTorch base class: forward = (maybe call) + multiply."""

    def __init__(self, integration_dims, grid_indices=None):
        self.integration_dims = integration_dims
        if grid_indices is None:
            self.grid_indices = integration_dims
        else:
            self.grid_indices = grid_indices
            assert len(grid_indices) == len(integration_dims)

    def multiply_coefficients(self, discretization, grid):
        raise NotImplementedError("Implement this method in derived class.")

    def __call__(self, function, grid):
        if callable(function):
            out = function(grid)
        else:
            out = function
        out = self.multiply_coefficients(out, grid)
        return out


class TrapezoidalQuadrature(BaseIntegrationQuadrature):
    # TODO(synk): the base class leaves multiply_coefficients abstract; the
    # trapezoidal rule (TorchIntegral's canonical subclass) is implemented here.
    def multiply_coefficients(self, discretization, grid):
        x = jnp.asarray(discretization)
        shape = x.shape
        ndim = x.ndim
        out_dtype = jnp.result_type(x.dtype, jnp.float32)

        # per-dim quadrature weights, kept in float32
        wmap = {}
        for d, gi in zip(self.integration_dims, self.grid_indices):
            d = d % ndim
            w = trapezoidal_weights(grid[gi])
            wmap[d] = wmap[d] * w if d in wmap else w

        if not wmap:
            return x.astype(out_dtype)

        # canonical 3-D view (lead, sublane, lane) — pure reshape, no transpose
        if ndim == 1:
            A, B, C = 1, 1, shape[0]
            lead_dims, sub_dim, lane_dim = [], None, 0
        else:
            A = int(np.prod(shape[:-2])) if ndim > 2 else 1
            B, C = shape[-2], shape[-1]
            lead_dims = list(range(ndim - 2))
            sub_dim, lane_dim = ndim - 2, ndim - 1
        x3 = x.reshape(A, B, C)

        ones = jnp.ones((1, 1, 1), jnp.float32)
        w_lane = wmap[lane_dim].reshape(1, 1, C) if lane_dim in wmap else ones
        w_sub = (wmap[sub_dim].reshape(1, B, 1)
                 if (sub_dim is not None and sub_dim in wmap) else ones)

        lead_int = [d for d in lead_dims if d in wmap]
        if lead_int:
            # combined weight over the flattened leading index (tiny: A floats)
            lead_shape = shape[:-2]
            wl = jnp.ones(lead_shape, jnp.float32)
            for d in lead_int:
                bshape = [1] * len(lead_shape)
                bshape[d] = shape[d]
                wl = wl * wmap[d].reshape(bshape)
            w_lead = wl.reshape(A, 1, 1)
        else:
            w_lead = ones

        out3 = _quad_multiply(x3, w_lead, w_sub, w_lane, out_dtype)
        return out3.reshape(shape)


if __name__ == "__main__":
    key = jax.random.PRNGKey(0)

    # NCHW tensor to be "integrated"
    B, C, H, W = 2, 4, 16, 16
    x = jax.random.normal(key, (B, C, H, W), dtype=jnp.float32)

    # grid[i] = 1-D sampling points for dim i
    grid_pts = [
        jnp.linspace(-1.0, 1.0, B, dtype=jnp.float32),
        jnp.linspace(-1.0, 1.0, C, dtype=jnp.float32),
        jnp.linspace(-1.0, 1.0, H, dtype=jnp.float32),
        jnp.linspace(-1.0, 1.0, W, dtype=jnp.float32),
    ]
    w1 = trapezoidal_weights(grid_pts[1])
    w2 = trapezoidal_weights(grid_pts[2])
    w3 = trapezoidal_weights(grid_pts[3])

    # case 1: single leading integration dim (channel); both forward branches
    quad1 = TrapezoidalQuadrature(integration_dims=[1])
    out_callable = quad1(lambda g: x, grid_pts)
    out_tensor = quad1(x, grid_pts)
    jax.block_until_ready(out_tensor)
    jax.block_until_ready(out_callable)
    ref1 = x * w1.reshape(1, C, 1, 1)
    np.testing.assert_allclose(np.asarray(out_tensor), np.asarray(ref1),
                               rtol=1e-6, atol=1e-6)
    np.testing.assert_allclose(np.asarray(out_callable), np.asarray(ref1),
                               rtol=1e-6, atol=1e-6)
    assert out_tensor.shape == (B, C, H, W)
    assert out_tensor.dtype == x.dtype

    # case 2: fused multi-dim (channel + last/lane dim) — single kernel pass
    quad2 = TrapezoidalQuadrature(integration_dims=[1, 3])
    out2 = quad2(x, grid_pts)
    jax.block_until_ready(out2)
    ref2 = x * w1.reshape(1, C, 1, 1) * w3.reshape(1, 1, 1, W)
    np.testing.assert_allclose(np.asarray(out2), np.asarray(ref2),
                               rtol=1e-6, atol=1e-6)

    # case 3: sublane integration dim (H)
    quad3 = TrapezoidalQuadrature(integration_dims=[2])
    out3 = quad3(x, grid_pts)
    jax.block_until_ready(out3)
    ref3 = x * w2.reshape(1, 1, H, 1)
    np.testing.assert_allclose(np.asarray(out3), np.asarray(ref3),
                               rtol=1e-6, atol=1e-6)

    print("KERNEL_OK")
</pallas_src>

<mosaic_0001>
module attributes {stable_mosaic.version = 11 : i64} {
  func.func @_quad_mul_kernel(%arg0: i32, %arg1: i32, %arg2: i32, %arg3: memref<8x16x16xf32, #tpu.memory_space<vmem>>, %arg4: memref<8x1x1xf32, #tpu.memory_space<vmem>>, %arg5: memref<1x1x1xf32, #tpu.memory_space<vmem>>, %arg6: memref<1x1x1xf32, #tpu.memory_space<vmem>>, %arg7: memref<8x16x16xf32, #tpu.memory_space<vmem>>) attributes {dimension_semantics = [#tpu.dimension_semantics<parallel>, #tpu.dimension_semantics<parallel>, #tpu.dimension_semantics<parallel>], iteration_bounds = array<i64: 1, 1, 1>, scalar_prefetch = 0 : i64, scratch_operands = 0 : i64, tpu.core_type = #tpu.core_type<tc>, window_params = [{transform_indices = @transform_0, window_bounds = array<i64: 8, 16, 16>}, {transform_indices = @transform_1, window_bounds = array<i64: 8, 1, 1>}, {pipeline_mode = #tpu.pipeline_mode<synchronous>, transform_indices = @transform_2, window_bounds = array<i64: 1, 1, 1>}, {pipeline_mode = #tpu.pipeline_mode<synchronous>, transform_indices = @transform_3, window_bounds = array<i64: 1, 1, 1>}, {transform_indices = @transform_4, window_bounds = array<i64: 8, 16, 16>}]} {
    %c0 = arith.constant 0 : index
    %c0_0 = arith.constant 0 : index
    %c0_1 = arith.constant 0 : index
    %0 = vector.load %arg4[%c0, %c0_0, %c0_1] : memref<8x1x1xf32, #tpu.memory_space<vmem>>, vector<8x1x1xf32>
    %c0_2 = arith.constant 0 : index
    %c0_3 = arith.constant 0 : index
    %c0_4 = arith.constant 0 : index
    %1 = vector.load %arg5[%c0_2, %c0_3, %c0_4] : memref<1x1x1xf32, #tpu.memory_space<vmem>>, vector<1x1x1xf32>
    %2 = vector.broadcast %1 : vector<1x1x1xf32> to vector<8x1x1xf32>
    %3 = arith.mulf %0, %2 : vector<8x1x1xf32>
    %c0_5 = arith.constant 0 : index
    %c0_6 = arith.constant 0 : index
    %c0_7 = arith.constant 0 : index
    %4 = vector.load %arg6[%c0_5, %c0_6, %c0_7] : memref<1x1x1xf32, #tpu.memory_space<vmem>>, vector<1x1x1xf32>
    %5 = vector.broadcast %4 : vector<1x1x1xf32> to vector<8x1x1xf32>
    %6 = arith.mulf %3, %5 : vector<8x1x1xf32>
    %c0_8 = arith.constant 0 : index
    %c0_9 = arith.constant 0 : index
    %c0_10 = arith.constant 0 : index
    %7 = vector.load %arg3[%c0_8, %c0_9, %c0_10] : memref<8x16x16xf32, #tpu.memory_space<vmem>>, vector<8x16x16xf32>
    %8 = vector.broadcast %6 : vector<8x1x1xf32> to vector<8x16x16xf32>
    %9 = arith.mulf %7, %8 : vector<8x16x16xf32>
    %c0_11 = arith.constant 0 : index
    %c0_12 = arith.constant 0 : index
    %c0_13 = arith.constant 0 : index
    %10 = vector.load %arg7[%c0_11, %c0_12, %c0_13] : memref<8x16x16xf32, #tpu.memory_space<vmem>>, vector<8x16x16xf32>
    tpu.vector_store %arg7[%c0_11, %c0_12, %c0_13], %9 {strides = array<i32>} : memref<8x16x16xf32, #tpu.memory_space<vmem>>, vector<8x16x16xf32>,
    return
  }
  func.func @transform_0(%arg0: i32, %arg1: i32, %arg2: i32) -> (i32, i32, i32) {
    %c0_i32 = arith.constant 0 : i32
    return %arg0, %arg1, %arg2 : i32, i32, i32
  }
  func.func @transform_1(%arg0: i32, %arg1: i32, %arg2: i32) -> (i32, i32, i32) {
    %c0_i32 = arith.constant 0 : i32
    %c0_i32_0 = arith.constant 0 : i32
    %c0_i32_1 = arith.constant 0 : i32
    return %arg0, %c0_i32, %c0_i32_0 : i32, i32, i32
  }
  func.func @transform_2(%arg0: i32, %arg1: i32, %arg2: i32) -> (i32, i32, i32) {
    %c0_i32 = arith.constant 0 : i32
    %c0_i32_0 = arith.constant 0 : i32
    %c0_i32_1 = arith.constant 0 : i32
    %c0_i32_2 = arith.constant 0 : i32
    return %c0_i32, %c0_i32_0, %c0_i32_1 : i32, i32, i32
  }
  func.func @transform_3(%arg0: i32, %arg1: i32, %arg2: i32) -> (i32, i32, i32) {
    %c0_i32 = arith.constant 0 : i32
    %c0_i32_0 = arith.constant 0 : i32
    %c0_i32_1 = arith.constant 0 : i32
    %c0_i32_2 = arith.constant 0 : i32
    return %c0_i32, %c0_i32_0, %c0_i32_1 : i32, i32, i32
  }
  func.func @transform_4(%arg0: i32, %arg1: i32, %arg2: i32) -> (i32, i32, i32) {
    %c0_i32 = arith.constant 0 : i32
    return %arg0, %arg1, %arg2 : i32, i32, i32
  }
}

</mosaic_0001>

<llo_original>
// kernel: tpu_custom_call.1
$region0: #{tpu_custom_call.1}
  #allocation0 [shape = 'u32[]', space=smem, size = 0x4, offset = 0x4, fixed_abs, tag = 'smem constant byte address 0x4 - core index']
  #allocation1 [shape = 'u32[144,128]{1,0:T(1,128)}', space=vmem, size = 0x12000, scoped, tag = 'internal scratch']
  #allocation2 [shape = 'f32[1,1,1]{2,1,0:T(1,128)S(1)}', space=vmem, size = 0x200, scoped, tag = 'scoped memory for tpu_custom_call.1']
  #allocation3 [shape = 'f32[1,1,1]{2,1,0:T(1,128)S(1)}', space=vmem, size = 0x200, scoped, tag = 'scoped memory for tpu_custom_call.1']
  %s0 = inlined_call_operand.hbm [shape: f32[8,16,16], index: 0, kind: input, shape index: {}]
  %s1 = inlined_call_operand.vmem [shape: f32[8,1,1], index: 1, kind: input, shape index: {}]
  %s2 = inlined_call_operand.<no memory space> [shape: f32[1,1,1], index: 2, kind: input, shape index: {}]
  %s3 = inlined_call_operand.<no memory space> [shape: f32[1,1,1], index: 3, kind: input, shape index: {}]
  %s4 = inlined_call_operand.hbm [shape: f32[8,16,16], index: 4, kind: output, shape index: {}]
  %s5 = sld [smem:[#allocation0]]
  $region30: #{tpu_custom_call.1} parent=0
    _
  %s7 = ssub.s32 1, %s5
  %s8 = scalar_select 0, %s7, %s5
  %v9 = vstv %s2
  %10 = vst [vmem:[#allocation2] sm:$0x1] %v9
  %v11 = vstv %s3
  %12 = vst [vmem:[#allocation3] sm:$0x1] %v11
  $region1: #{tpu_custom_call.1} parent=0
    #allocation4 [shape = 'u8[65536]{0}', space=vmem, size = 0x10000, scoped, tag = 'input window, operand 0, single buffered']
    #allocation5 [shape = 's32[1]{0}', space=sflag, size = 0x4, scoped, tag = 'scoped memory for tpu_custom_call.1']
    #allocation6 [shape = 's32[1]{0}', space=sflag, size = 0x4, scoped, tag = 'scoped memory for tpu_custom_call.1']
    #allocation7 [shape = 'u8[65536]{0}', space=vmem, size = 0x10000, scoped, tag = 'output window, operand 0, single buffered']
    %13 = vsyncpa [#allocation5], 0
    %14 = vsyncpa [#allocation6], 0
    // Predicated region
    $region2: #{tpu_custom_call.1} parent=1 // pred_check
      _
    $region3: #{tpu_custom_call.1} parent=1 // pred_check_branch
      %16 = sbr.rel (0) target = $region5
    $region4: #{tpu_custom_call.1} parent=1 // pred_region
      %s18 = ssub.s32 2048, 2048
      %19 = vsyncadd [#allocation5], %s18
      %s20 = sshll.u32 [#allocation4], 4
      %s21 = int_to_ptr.vmem [resolvable:$true] %s20
      %26 = dma.hbm_to_vmem [thread:$0]  %s0, 2048, %s21, [#allocation5], 128, 128, 8
    $region5: #{tpu_custom_call.1} parent=1 // pred_fallthru
      _
    // Predicated region
    $region6: #{tpu_custom_call.1} parent=1 // pred_check
      _
    $region7: #{tpu_custom_call.1} parent=1 // pred_check_branch
      %28 = sbr.rel (0) target = $region9
    $region8: #{tpu_custom_call.1} parent=1 // pred_region
      _
    $region9: #{tpu_custom_call.1} parent=1 // pred_fallthru
      _
    // Predicated region
    $region10: #{tpu_custom_call.1} parent=1 // pred_check
      _
    $region11: #{tpu_custom_call.1} parent=1 // pred_check_branch
      %30 = sbr.rel (0) target = $region13
    $region12: #{tpu_custom_call.1} parent=1 // pred_region
      _
    $region13: #{tpu_custom_call.1} parent=1 // pred_fallthru
      _
    // Predicated region
    $region14: #{tpu_custom_call.1} parent=1 // pred_check
      _
    $region15: #{tpu_custom_call.1} parent=1 // pred_check_branch
      %32 = sbr.rel (0) target = $region17
    $region16: #{tpu_custom_call.1} parent=1 // pred_region
      _
    $region17: #{tpu_custom_call.1} parent=1 // pred_fallthru
      _
    // Predicated region
    $region18: #{tpu_custom_call.1} parent=1 // pred_check
      _
    $region19: #{tpu_custom_call.1} parent=1 // pred_check_branch
      %34 = sbr.rel (0) target = $region21
    $region20: #{tpu_custom_call.1} parent=1 // pred_region
      %35 = dma.done [#allocation5], 2048
    $region21: #{tpu_custom_call.1} parent=1 // pred_fallthru
      _
    %v36 = vld [vmem:[%s1] sm:$0x1]
    %v37 = vld [vmem:[%s1 + $0x1] sm:$0x1]
    %v38 = vld [vmem:[%s1 + $0x2] sm:$0x1]
    %v39 = vld [vmem:[%s1 + $0x3] sm:$0x1]
    %v40 = vld [vmem:[%s1 + $0x4] sm:$0x1]
    %v41 = vld [vmem:[%s1 + $0x5] sm:$0x1]
    %v42 = vld [vmem:[%s1 + $0x6] sm:$0x1]
    %v43 = vld [vmem:[%s1 + $0x7] sm:$0x1]
    %v44 = vld [vmem:[#allocation2] sm:$0x1]
    %v45 = vmul.f32 %v36, %v44
    %v46 = vmul.f32 %v37, %v44
    %v47 = vmul.f32 %v38, %v44
    %v48 = vmul.f32 %v39, %v44
    %v49 = vmul.f32 %v40, %v44
    %v50 = vmul.f32 %v41, %v44
    %v51 = vmul.f32 %v42, %v44
    %v52 = vmul.f32 %v43, %v44
    %v53 = vld [vmem:[#allocation3] sm:$0x1]
    %v54 = vmul.f32 %v45, %v53
    %v55 = vmul.f32 %v46, %v53
    %v56 = vmul.f32 %v47, %v53
    %v57 = vmul.f32 %v48, %v53
    %v58 = vmul.f32 %v49, %v53
    %v59 = vmul.f32 %v50, %v53
    %v60 = vmul.f32 %v51, %v53
    %v61 = vmul.f32 %v52, %v53
    %v62 = vld [vmem:[#allocation4] sm:$0xff]
    %v63 = vld [vmem:[#allocation4 + $0x8] sm:$0xff]
    %v64 = vld [vmem:[#allocation4 + $0x10] sm:$0xff]
    %v65 = vld [vmem:[#allocation4 + $0x18] sm:$0xff]
    %v66 = vld [vmem:[#allocation4 + $0x20] sm:$0xff]
    %v67 = vld [vmem:[#allocation4 + $0x28] sm:$0xff]
    %v68 = vld [vmem:[#allocation4 + $0x30] sm:$0xff]
    %v69 = vld [vmem:[#allocation4 + $0x38] sm:$0xff]
    %v70 = vld [vmem:[#allocation4 + $0x40] sm:$0xff]
    %v71 = vld [vmem:[#allocation4 + $0x48] sm:$0xff]
    %v72 = vld [vmem:[#allocation4 + $0x50] sm:$0xff]
    %v73 = vld [vmem:[#allocation4 + $0x58] sm:$0xff]
    %v74 = vld [vmem:[#allocation4 + $0x60] sm:$0xff]
    %v75 = vld [vmem:[#allocation4 + $0x68] sm:$0xff]
    %v76 = vld [vmem:[#allocation4 + $0x70] sm:$0xff]
    %v77 = vld [vmem:[#allocation4 + $0x78] sm:$0xff]
    %v86 = vlaneseq
    %v87 = vshrl.u32 %v86, 7
    %v88 = vsub.s32 0, %v87
    %v89 = vrot.slane %v54, %v88
    %v90 = vlaneseq
    %v91 = vshrl.u32 %v90, 7
    %v92 = vsub.s32 0, %v91
    %v93 = vrot.slane %v55, %v92
    %v94 = vlaneseq
    %v95 = vshrl.u32 %v94, 7
    %v96 = vsub.s32 0, %v95
    %v97 = vrot.slane %v56, %v96
    %v98 = vlaneseq
    %v99 = vshrl.u32 %v98, 7
    %v100 = vsub.s32 0, %v99
    %v101 = vrot.slane %v57, %v100
    %v102 = vlaneseq
    %v103 = vshrl.u32 %v102, 7
    %v104 = vsub.s32 0, %v103
    %v105 = vrot.slane %v58, %v104
    %v106 = vlaneseq
    %v107 = vshrl.u32 %v106, 7
    %v108 = vsub.s32 0, %v107
    %v109 = vrot.slane %v59, %v108
    %v110 = vlaneseq
    %v111 = vshrl.u32 %v110, 7
    %v112 = vsub.s32 0, %v111
    %v113 = vrot.slane %v60, %v112
    %v114 = vlaneseq
    %v115 = vshrl.u32 %v114, 7
    %v116 = vsub.s32 0, %v115
    %v117 = vrot.slane %v61, %v116
    %118 = vset.pattern.permute.xlu0 0
    %119 = vperm.xlu0 %118, %v89
    %v120 = vpop.permute.xlu0 %119
    %122 = vset.pattern.permute.xlu0 0
    %123 = vperm.xlu0 %122, %v93
    %v124 = vpop.permute.xlu0 %123
    %126 = vset.pattern.permute.xlu0 0
    %127 = vperm.xlu0 %126, %v97
    %v128 = vpop.permute.xlu0 %127
    %130 = vset.pattern.permute.xlu0 0
    %131 = vperm.xlu0 %130, %v101
    %v132 = vpop.permute.xlu0 %131
    %134 = vset.pattern.permute.xlu0 0
    %135 = vperm.xlu0 %134, %v105
    %v136 = vpop.permute.xlu0 %135
    %138 = vset.pattern.permute.xlu0 0
    %139 = vperm.xlu0 %138, %v109
    %v140 = vpop.permute.xlu0 %139
    %142 = vset.pattern.permute.xlu0 0
    %143 = vperm.xlu0 %142, %v113
    %v144 = vpop.permute.xlu0 %143
    %146 = vset.pattern.permute.xlu0 0
    %147 = vperm.xlu0 %146, %v117
    %v148 = vpop.permute.xlu0 %147
    %v150 = vmul.f32 %v62, %v120
    %v151 = vmul.f32 %v63, %v120
    %v152 = vmul.f32 %v64, %v124
    %v153 = vmul.f32 %v65, %v124
    %v154 = vmul.f32 %v66, %v128
    %v155 = vmul.f32 %v67, %v128
    %v156 = vmul.f32 %v68, %v132
    %v157 = vmul.f32 %v69, %v132
    %v158 = vmul.f32 %v70, %v136
    %v159 = vmul.f32 %v71, %v136
    %v160 = vmul.f32 %v72, %v140
    %v161 = vmul.f32 %v73, %v140
    %v162 = vmul.f32 %v74, %v144
    %v163 = vmul.f32 %v75, %v144
    %v164 = vmul.f32 %v76, %v148
    %v165 = vmul.f32 %v77, %v148
    %vm166 = vcmask 130048
    %167 = vst.msk [vmem:[#allocation7] sm:$0xff] %vm166, %v150
    %168 = vst.msk [vmem:[#allocation7 + $0x8] sm:$0xff] %vm166, %v151
    %169 = vst.msk [vmem:[#allocation7 + $0x10] sm:$0xff] %vm166, %v152
    %170 = vst.msk [vmem:[#allocation7 + $0x18] sm:$0xff] %vm166, %v153
    %171 = vst.msk [vmem:[#allocation7 + $0x20] sm:$0xff] %vm166, %v154
    %172 = vst.msk [vmem:[#allocation7 + $0x28] sm:$0xff] %vm166, %v155
    %173 = vst.msk [vmem:[#allocation7 + $0x30] sm:$0xff] %vm166, %v156
    %174 = vst.msk [vmem:[#allocation7 + $0x38] sm:$0xff] %vm166, %v157
    %175 = vst.msk [vmem:[#allocation7 + $0x40] sm:$0xff] %vm166, %v158
    %176 = vst.msk [vmem:[#allocation7 + $0x48] sm:$0xff] %vm166, %v159
    %177 = vst.msk [vmem:[#allocation7 + $0x50] sm:$0xff] %vm166, %v160
    %178 = vst.msk [vmem:[#allocation7 + $0x58] sm:$0xff] %vm166, %v161
    %179 = vst.msk [vmem:[#allocation7 + $0x60] sm:$0xff] %vm166, %v162
    %180 = vst.msk [vmem:[#allocation7 + $0x68] sm:$0xff] %vm166, %v163
    %181 = vst.msk [vmem:[#allocation7 + $0x70] sm:$0xff] %vm166, %v164
    %182 = vst.msk [vmem:[#allocation7 + $0x78] sm:$0xff] %vm166, %v165
    // Predicated region
    $region22: #{tpu_custom_call.1} parent=1 // pred_check
      _
    $region23: #{tpu_custom_call.1} parent=1 // pred_check_branch
      %184 = sbr.rel (0) target = $region25
    $region24: #{tpu_custom_call.1} parent=1 // pred_region
      %s186 = ssub.s32 2048, 2048
      %187 = vsyncadd [#allocation6], %s186
      %s188 = sshll.u32 [#allocation7], 4
      %s189 = int_to_ptr.vmem [resolvable:$true] %s188
      %194 = dma.vmem_to_hbm [thread:$0]  %s189, 2048, %s4, [#allocation6], 128, 128, 8
    $region25: #{tpu_custom_call.1} parent=1 // pred_fallthru
      _
    // Predicated region
    $region26: #{tpu_custom_call.1} parent=1 // pred_check
      _
    $region27: #{tpu_custom_call.1} parent=1 // pred_check_branch
      %196 = sbr.rel (0) target = $region29
    $region28: #{tpu_custom_call.1} parent=1 // pred_region
      %197 = dma.done [#allocation6], 2048
    $region29: #{tpu_custom_call.1} parent=1 // pred_fallthru
      _
    %198 = vsyncpa [#allocation5], 1
    %199 = vsyncpa [#allocation6], 1

</llo_original>
